<compile_context>
chip_gen: v7x
topology: tpu7x:2x2x1
jax: 0.10.0
libtpu: 0.0.40
codegen_flags: <defaults>
</compile_context>

<pallas_src>
import jax
import jax.numpy as jnp
from jax.experimental import pallas as pl
from jax.experimental.pallas import tpu as pltpu


def _round_up(v, m):
    return (v + m - 1) // m * m


def _expand_embed_kernel(x_ref, w_ref, b_ref, o_ref):
    # x_ref: (TM, 3*Cin)   current row tile of the fused-tap input
    # w_ref: (3*Cin, Cout_p) folded conv weights (all three taps)
    # b_ref: (1, Cout_p)   bias in f32
    # o_ref: (TM, Cout_p)
    acc = jnp.dot(x_ref[...], w_ref[...], preferred_element_type=jnp.float32)
    o_ref[...] = (acc + b_ref[...]).astype(o_ref.dtype)


def _vmem_budget_bytes():
    """Per-core VMEM budget with headroom (generation aware, capped at 100 MiB)."""
    try:
        cap = pltpu.get_tpu_info().vmem_capacity_bytes
    except Exception:
        cap = 64 << 20  # conservative default (v7x per-TC VMEM)
    return int(min(max(cap - (16 << 20), 8 << 20), 100 << 20))


def _tile_ws_bytes(tm, c3, cout_p, in_bytes, out_bytes):
    """VMEM working set of one grid step, using lane/sublane-padded shapes."""
    tm8 = _round_up(max(tm, 8), 8)
    c3_l = _round_up(c3, 128)
    cout_l = _round_up(cout_p, 128)
    x_blk = 2 * tm8 * c3_l * in_bytes                 # double-buffered input tile
    o_blk = 2 * tm8 * cout_l * out_bytes              # double-buffered output tile
    w_blk = 2 * _round_up(c3, 8) * cout_l * in_bytes  # weights (conservatively x2)
    b_blk = 2 * 8 * cout_l * 4                        # bias (f32)
    acc = tm8 * cout_l * 4                            # f32 accumulator / vregs
    return x_blk + o_blk + w_blk + b_blk + acc


def _pick_row_tile(M, c3, cout_p, in_bytes, out_bytes, budget):
    """Largest row tile (multiple of 8) whose padded working set fits the budget."""
    for tm in (32768, 16384, 8192, 4096, 2048, 1024, 512, 256, 128, 64, 32, 16, 8):
        if _tile_ws_bytes(tm, c3, cout_p, in_bytes, out_bytes) <= budget:
            return min(tm, _round_up(M, 8))
    return 8


def expand_embedding(x, conv_w, conv_b):
    """x: (B, L, Cin); conv_w: (Cout, Cin, 3); conv_b: (Cout,) -> (B, L, Cout)."""
    B, L, Cin = x.shape
    Cout = conv_w.shape[0]
    C3 = 3 * Cin

    # Lane-dense output padding only when it is cheap (Cout >= 128, waste < 12.5%);
    # otherwise write the exact Cout (masked vst hides under the DMA).
    Cout_p = Cout
    if Cout >= 128 and Cout % 128 != 0:
        padded = _round_up(Cout, 128)
        if (padded - Cout) * 8 < padded:
            Cout_p = padded

    # Fused-tap input: tap k pairs with x[l-1+k] (circular), identical to PyTorch's
    # Conv1d(kernel_size=3, padding=1, padding_mode='circular') cross-correlation.
    x3 = jnp.concatenate(
        [jnp.roll(x, 1, axis=1), x, jnp.roll(x, -1, axis=1)], axis=-1)
    x3 = x3.reshape(B * L, C3)

    # Fold the 3 taps into one (3*Cin, Cout_p) matrix: row k*Cin + c <-> tap k, chan c.
    # Intentional dtype choice: weights follow x.dtype (as a single-dtype PyTorch
    # module would); accumulation stays f32 on the MXU.
    w = jnp.transpose(conv_w, (2, 1, 0)).reshape(C3, Cout).astype(x.dtype)
    bias = conv_b.astype(jnp.float32)
    if Cout_p != Cout:
        w = jnp.pad(w, ((0, 0), (0, Cout_p - Cout)))
        bias = jnp.pad(bias, (0, Cout_p - Cout))
    bias2d = bias.reshape(1, Cout_p)

    in_bytes = x.dtype.itemsize
    out_bytes = x.dtype.itemsize
    budget = _vmem_budget_bytes()

    # Row tiling over the flattened (B*L) axis.
    M = B * L
    TM = _pick_row_tile(M, C3, Cout_p, in_bytes, out_bytes, budget)
    n_tiles = pl.cdiv(M, TM)
    if n_tiles == 1 and M > 8:
        n_tiles = 2  # keep a 2-TC-shardable parallel axis on v7x (no-op on v5e/v6e)
    TM = _round_up(pl.cdiv(M, n_tiles), 8)
    M_pad = n_tiles * TM
    if M_pad != M:
        x3 = jnp.pad(x3, ((0, M_pad - M), (0, 0)))

    ws = _tile_ws_bytes(TM, C3, Cout_p, in_bytes, out_bytes)
    vmem_limit = int(min(budget, max(ws + (4 << 20), 16 << 20)))

    cost = pl.CostEstimate(
        flops=2 * M_pad * C3 * Cout_p,
        transcendentals=0,
        bytes_accessed=(in_bytes * (M_pad * C3 + C3 * Cout_p)
                        + 4 * Cout_p
                        + out_bytes * M_pad * Cout_p),
    )

    # TODO(synk): for very large Cout add a second (Cout-tile) grid axis so the
    # resident weight block stays bounded on 64 MiB (v7x) VMEM.
    out_flat = pl.pallas_call(
        _expand_embed_kernel,
        out_shape=jax.ShapeDtypeStruct((M_pad, Cout_p), x.dtype),
        grid_spec=pltpu.PrefetchScalarGridSpec(
            num_scalar_prefetch=0,
            grid=(n_tiles,),
            in_specs=[
                pl.BlockSpec((TM, C3), lambda i: (i, 0)),
                pl.BlockSpec((C3, Cout_p), lambda i: (0, 0)),
                pl.BlockSpec((1, Cout_p), lambda i: (0, 0)),
            ],
            out_specs=pl.BlockSpec((TM, Cout_p), lambda i: (i, 0)),
        ),
        compiler_params=pltpu.CompilerParams(
            dimension_semantics=("parallel",),
            vmem_limit_bytes=vmem_limit,
        ),
        cost_estimate=cost,
    )(x3, w, bias2d)

    if M_pad != M or Cout_p != Cout:
        out_flat = out_flat[:M, :Cout]
    return out_flat.reshape(B, L, Cout)


def _reference(x, conv_w, conv_b):
    """Pure-JAX reference of Conv1d(k=3, circular padding) in (B, L, C) layout."""
    x_prev = jnp.roll(x, shift=1, axis=1)
    x_next = jnp.roll(x, shift=-1, axis=1)
    out = (
        jnp.einsum("blc,oc->blo", x_prev, conv_w[:, :, 0])
        + jnp.einsum("blc,oc->blo", x, conv_w[:, :, 1])
        + jnp.einsum("blc,oc->blo", x_next, conv_w[:, :, 2])
    )
    return out + conv_b[None, None, :]


def _make_params(key, in_dim, out_dim):
    kw, kb = jax.random.split(key)
    fan_in = in_dim * 3
    bound = 1.0 / (fan_in ** 0.5)
    conv_w = jax.random.uniform(kw, (out_dim, in_dim, 3), jnp.float32, -bound, bound)
    conv_b = jax.random.uniform(kb, (out_dim,), jnp.float32, -bound, bound)
    return conv_w, conv_b


if __name__ == "__main__":
    key = jax.random.PRNGKey(0)

    # Test 1: module-sized shapes (batch=2, seq=8, in_dim=4, out_dim=32).
    k1, k2, k3, k4 = jax.random.split(key, 4)
    B, L, IN_DIM, OUT_DIM = 2, 8, 4, 32
    x = jax.random.normal(k1, (B, L, IN_DIM), dtype=jnp.float32)
    conv_w, conv_b = _make_params(k2, IN_DIM, OUT_DIM)
    out = jax.block_until_ready(expand_embedding(x, conv_w, conv_b))
    ref = _reference(x, conv_w, conv_b)
    assert out.shape == (B, L, OUT_DIM)
    assert jnp.allclose(out, ref, atol=1e-5, rtol=1e-5)

    # Test 2: multi-tile / padded-row / masked-store path (odd sizes).
    B2, L2, IN2, OUT2 = 3, 40, 6, 48
    x2 = jax.random.normal(k3, (B2, L2, IN2), dtype=jnp.float32)
    conv_w2, conv_b2 = _make_params(k4, IN2, OUT2)
    out2 = jax.block_until_ready(expand_embedding(x2, conv_w2, conv_b2))
    ref2 = _reference(x2, conv_w2, conv_b2)
    assert out2.shape == (B2, L2, OUT2)
    assert jnp.allclose(out2, ref2, atol=1e-5, rtol=1e-5)

    print("KERNEL_OK")
</pallas_src>

<mosaic_0001>
module attributes {stable_mosaic.version = 11 : i64} {
  func.func @_expand_embed_kernel(%arg0: i32, %arg1: memref<8x12xf32, #tpu.memory_space<vmem>>, %arg2: memref<12x32xf32, #tpu.memory_space<vmem>>, %arg3: memref<1x32xf32, #tpu.memory_space<vmem>>, %arg4: memref<8x32xf32, #tpu.memory_space<vmem>>) attributes {dimension_semantics = [#tpu.dimension_semantics<parallel>], iteration_bounds = array<i64: 2>, scalar_prefetch = 0 : i64, scratch_operands = 0 : i64, tpu.core_type = #tpu.core_type<tc>, window_params = [{transform_indices = @transform_0, window_bounds = array<i64: 8, 12>}, {pipeline_mode = #tpu.pipeline_mode<synchronous>, transform_indices = @transform_1, window_bounds = array<i64: 12, 32>}, {pipeline_mode = #tpu.pipeline_mode<synchronous>, transform_indices = @transform_2, window_bounds = array<i64: 1, 32>}, {transform_indices = @transform_3, window_bounds = array<i64: 8, 32>}]} {
    %c0 = arith.constant 0 : index
    %c0_0 = arith.constant 0 : index
    %0 = vector.load %arg1[%c0, %c0_0] : memref<8x12xf32, #tpu.memory_space<vmem>>, vector<8x12xf32>
    %c0_1 = arith.constant 0 : index
    %c0_2 = arith.constant 0 : index
    %1 = vector.load %arg2[%c0_1, %c0_2] : memref<12x32xf32, #tpu.memory_space<vmem>>, vector<12x32xf32>
    %cst = arith.constant dense<0.000000e+00> : vector<8x32xf32>
    %2 = tpu.matmul %0, %1, %cst {dimension_numbers = #tpu.dot_dimension_numbers<[1], [0], [0], [1], [0, 0, 1, 1], [], []>} : vector<8x12xf32>, vector<12x32xf32>, vector<8x32xf32> -> vector<8x32xf32>
    %c0_3 = arith.constant 0 : index
    %c0_4 = arith.constant 0 : index
    %3 = vector.load %arg3[%c0_3, %c0_4] : memref<1x32xf32, #tpu.memory_space<vmem>>, vector<1x32xf32>
    %4 = vector.broadcast %3 : vector<1x32xf32> to vector<8x32xf32>
    %5 = arith.addf %2, %4 : vector<8x32xf32>
    %c0_5 = arith.constant 0 : index
    %c0_6 = arith.constant 0 : index
    %6 = vector.load %arg4[%c0_5, %c0_6] : memref<8x32xf32, #tpu.memory_space<vmem>>, vector<8x32xf32>
    tpu.vector_store %arg4[%c0_5, %c0_6], %5 {strides = array<i32>} : memref<8x32xf32, #tpu.memory_space<vmem>>, vector<8x32xf32>,
    return
  }
  func.func @transform_0(%arg0: i32) -> (i32, i32) {
    %c0_i32 = arith.constant 0 : i32
    %c0_i32_0 = arith.constant 0 : i32
    return %arg0, %c0_i32 : i32, i32
  }
  func.func @transform_1(%arg0: i32) -> (i32, i32) {
    %c0_i32 = arith.constant 0 : i32
    %c0_i32_0 = arith.constant 0 : i32
    %c0_i32_1 = arith.constant 0 : i32
    return %c0_i32, %c0_i32_0 : i32, i32
  }
  func.func @transform_2(%arg0: i32) -> (i32, i32) {
    %c0_i32 = arith.constant 0 : i32
    %c0_i32_0 = arith.constant 0 : i32
    %c0_i32_1 = arith.constant 0 : i32
    return %c0_i32, %c0_i32_0 : i32, i32
  }
  func.func @transform_3(%arg0: i32) -> (i32, i32) {
    %c0_i32 = arith.constant 0 : i32
    %c0_i32_0 = arith.constant 0 : i32
    return %arg0, %c0_i32 : i32, i32
  }
}

</mosaic_0001>

<llo_original>
// kernel: tpu_custom_call.1
$region0: #{tpu_custom_call.1}
  #allocation0 [shape = 'u32[]', space=smem, size = 0x4, offset = 0x4, fixed_abs, tag = 'smem constant byte address 0x4 - core index']
  #allocation1 [shape = 'u32[144,128]{1,0:T(1,128)}', space=vmem, size = 0x12000, scoped, tag = 'internal scratch']
  %s0 = inlined_call_operand.hbm [shape: f32[16,12], index: 0, kind: input, shape index: {}]
  %s1 = inlined_call_operand.hbm [shape: f32[12,32], index: 1, kind: input, shape index: {}]
  %s2 = inlined_call_operand.vmem [shape: f32[1,32], index: 2, kind: input, shape index: {}]
  %s3 = inlined_call_operand.hbm [shape: f32[16,32], index: 3, kind: output, shape index: {}]
  %s4 = sld [smem:[#allocation0]]
  $region53: #{tpu_custom_call.1} parent=0
    _
  %s6 = ssub.s32 1, %s4
  %s7 = scalar_select 0, %s6, %s4
  $region1: #{tpu_custom_call.1} parent=0
    #allocation2 [shape = 'u8[8192]{0}', space=vmem, size = 0x2000, scoped, tag = 'input window, operand 0']
    #allocation3 [shape = 's32[2]{0}', space=sflag, size = 0x8, scoped, tag = 'scoped memory for tpu_custom_call.1']
    #allocation4 [shape = 's32[2]{0}', space=sflag, size = 0x8, scoped, tag = 'scoped memory for tpu_custom_call.1']
    #allocation5 [shape = 'u8[8192]{0}', space=vmem, size = 0x2000, scoped, tag = 'input window, operand 1, single buffered']
    #allocation6 [shape = 's32[1]{0}', space=sflag, size = 0x4, scoped, tag = 'scoped memory for tpu_custom_call.1']
    #allocation7 [shape = 'u8[8192]{0}', space=vmem, size = 0x2000, scoped, tag = 'output window, operand 0']
    %8 = vsyncpa [#allocation3], 0
    %s9 = scalar_lea.sflag [#allocation3], 1
    %10 = vsyncpa %s9, 0
    %11 = vsyncpa [#allocation6], 0
    %12 = vsyncpa [#allocation4], 0
    %s13 = scalar_lea.sflag [#allocation4], 1
    %14 = vsyncpa %s13, 0
    loop: start=0, step=1, limit=4
    $region2: #{tpu_custom_call.1} parent=1 // loop_pre_header
      _
    $region3: #{tpu_custom_call.1} parent=1 // loop_header
      %s16 = sphi 0, %s20
      %p17 = scmp.ge.s32.totalorder %s16, 4
      %s26 = sphi 0, %s28
      %s29 = sphi 0, %s26
      %s30 = sphi 0, %s29
      %s46 = sphi 0, %s30
      %s50 = sphi 0, %s50
      %s52 = sphi 0, %s50
      %s53 = sphi 0, %s52
      %s67 = sphi 0, %s53
      %s71 = sphi 0, %s71
      %s73 = sphi 0, %s71
      %s74 = sphi 0, %s73
      %s88 = sphi 0, %s74
      %s94 = sphi 0, %s96
      %s97 = sphi 0, %s94
      %s98 = sphi 0, %s97
      %s114 = sphi 0, %s98
    $region4: #{tpu_custom_call.1} parent=1 // loop_header_branch
      %19 = sbr.rel (%p17) target = $region8
    $region5: #{tpu_custom_call.1} parent=1 // loop_body
      %s21 = ssub.s32 %s16, 1
      %s22 = ssub.s32 %s16, 2
      %s23 = sadd.s32 %s16, 1
      %s24 = ssub.s32 %s16, %s23
      %p25 = scmp.eq.s32.totalorder %s24, 0
      %s27 = sadd.s32 %s26, 1
      %s28 = scalar_select %p25, %s26, %s27
      %p31 = pneg %p25
      %p32 = scmp.eq.s32.totalorder %s16, 1
      %p33 = por %p31, %p32
      %p34 = scmp.ne.s32.totalorder %s26, %s29
      %p35 = scmp.eq.s32.totalorder %s16, 0
      %p36 = por %p34, %p35
      %p37 = scmp.ne.s32.totalorder %s26, %s29
      %p38 = scmp.eq.s32.totalorder %s21, 1
      %p39 = por %p37, %p38
      %p40 = scmp.ne.s32.totalorder %s29, %s30
      %p41 = scmp.eq.s32.totalorder %s21, 0
      %p42 = por %p40, %p41
      %p43 = scmp.ne.s32.totalorder %s29, %s30
      %p44 = scmp.eq.s32.totalorder %s22, 1
      %p45 = por %p43, %p44
      %p47 = scmp.ne.s32.totalorder %s30, %s46
      %p48 = scmp.eq.s32.totalorder %s22, 0
      %p49 = por %p47, %p48
      %s51 = sadd.s32 %s50, 1
      %p54 = scmp.eq.s32.totalorder %s16, 1
      %p55 = scmp.ne.s32.totalorder %s50, %s52
      %p56 = scmp.eq.s32.totalorder %s16, 0
      %p57 = por %p55, %p56
      %p58 = scmp.ne.s32.totalorder %s50, %s52
      %p59 = scmp.eq.s32.totalorder %s21, 1
      %p60 = por %p58, %p59
      %p61 = scmp.ne.s32.totalorder %s52, %s53
      %p62 = scmp.eq.s32.totalorder %s21, 0
      %p63 = por %p61, %p62
      %p64 = scmp.ne.s32.totalorder %s52, %s53
      %p65 = scmp.eq.s32.totalorder %s22, 1
      %p66 = por %p64, %p65
      %p68 = scmp.ne.s32.totalorder %s53, %s67
      %p69 = scmp.eq.s32.totalorder %s22, 0
      %p70 = por %p68, %p69
      %s72 = sadd.s32 %s71, 1
      %p75 = scmp.eq.s32.totalorder %s16, 1
      %p76 = scmp.ne.s32.totalorder %s71, %s73
      %p77 = scmp.eq.s32.totalorder %s16, 0
      %p78 = por %p76, %p77
      %p79 = scmp.ne.s32.totalorder %s71, %s73
      %p80 = scmp.eq.s32.totalorder %s21, 1
      %p81 = por %p79, %p80
      %p82 = scmp.ne.s32.totalorder %s73, %s74
      %p83 = scmp.eq.s32.totalorder %s21, 0
      %p84 = por %p82, %p83
      %p85 = scmp.ne.s32.totalorder %s73, %s74
      %p86 = scmp.eq.s32.totalorder %s22, 1
      %p87 = por %p85, %p86
      %p89 = scmp.ne.s32.totalorder %s74, %s88
      %p90 = scmp.eq.s32.totalorder %s22, 0
      %p91 = por %p89, %p90
      %s92 = ssub.s32 %s16, %s23
      %p93 = scmp.eq.s32.totalorder %s92, 0
      %s95 = sadd.s32 %s94, 1
      %s96 = scalar_select %p93, %s94, %s95
      %p99 = pneg %p93
      %p100 = scmp.eq.s32.totalorder %s16, 1
      %p101 = por %p99, %p100
      %p102 = scmp.ne.s32.totalorder %s94, %s97
      %p103 = scmp.eq.s32.totalorder %s16, 0
      %p104 = por %p102, %p103
      %p105 = scmp.ne.s32.totalorder %s94, %s97
      %p106 = scmp.eq.s32.totalorder %s21, 1
      %p107 = por %p105, %p106
      %p108 = scmp.ne.s32.totalorder %s97, %s98
      %p109 = scmp.eq.s32.totalorder %s21, 0
      %p110 = por %p108, %p109
      %p111 = scmp.ne.s32.totalorder %s97, %s98
      %p112 = scmp.eq.s32.totalorder %s22, 1
      %p113 = por %p111, %p112
      %p115 = scmp.ne.s32.totalorder %s98, %s114
      %p116 = scmp.eq.s32.totalorder %s22, 0
      %p117 = por %p115, %p116
      %p118 = scmp.le.s32.totalorder 1, %s16
      %p119 = scmp.lt.s32.totalorder %s16, 3
      %p120 = pnand %p118, %p119
      %p121 = pneg %p120
      // Predicated region
      $region9: #{tpu_custom_call.1} parent=5 // pred_check
        _
      $region10: #{tpu_custom_call.1} parent=5 // pred_check_branch
        %123 = sbr.rel (%p120) target = $region12
      $region11: #{tpu_custom_call.1} parent=5 // pred_region
        %s124 = ssub.s32 %s16, 1
        // Predicated region
        $region13: #{tpu_custom_call.1} parent=11 // pred_check
          %p125 = pneg %p63
        $region14: #{tpu_custom_call.1} parent=11 // pred_check_branch
          %127 = sbr.rel (%p125) target = $region16
        $region15: #{tpu_custom_call.1} parent=11 // pred_region
          %s129 = ssub.s32 256, 256
          %130 = vsyncadd [#allocation6], %s129
          %s131 = sshll.u32 [#allocation5], 4
          %s132 = int_to_ptr.vmem [resolvable:$true] %s131
          %137 = dma.hbm_to_vmem [thread:$0]  %s1, 256, %s132, [#allocation6], 128, 128, 8
        $region16: #{tpu_custom_call.1} parent=11 // pred_fallthru
          _
        // Predicated region
        $region17: #{tpu_custom_call.1} parent=11 // pred_check
          %p138 = pneg %p84
        $region18: #{tpu_custom_call.1} parent=11 // pred_check_branch
          %140 = sbr.rel (%p138) target = $region20
        $region19: #{tpu_custom_call.1} parent=11 // pred_region
          _
        $region20: #{tpu_custom_call.1} parent=11 // pred_fallthru
          _
      $region12: #{tpu_custom_call.1} parent=5 // pred_fallthru
        _
      %p141 = scmp.lt.s32.totalorder %s16, 2
      // Predicated region
      $region21: #{tpu_custom_call.1} parent=5 // pred_check
        %p142 = pneg %p141
      $region22: #{tpu_custom_call.1} parent=5 // pred_check_branch
        %144 = sbr.rel (%p142) target = $region24
      $region23: #{tpu_custom_call.1} parent=5 // pred_region
        // Predicated region
        $region25: #{tpu_custom_call.1} parent=23 // pred_check
          %p145 = pneg %p36
        $region26: #{tpu_custom_call.1} parent=23 // pred_check_branch
          %147 = sbr.rel (%p145) target = $region28
        $region27: #{tpu_custom_call.1} parent=23 // pred_region
          %s148 = sand.u32 %s26, 1
          %s149 = scalar_lea.sflag [#allocation3], %s148
          %s150 = sand.u32 %s26, 1
          %s151 = smul.addr %s150, 8
          %s152 = scalar_lea.vmem [#allocation2], %s151
          %s154 = ssub.s32 128, 128
          %155 = vsyncadd %s149, %s154
          %s156 = smul.addr %s16, 128
          %s157 = scalar_lea.hbm %s0, %s156
          %s159 = sshll.u32 %s152, 4
          %s160 = int_to_ptr.vmem [resolvable:$true] %s159
          %162 = dma.hbm_to_vmem [thread:$0]  %s157, 128, %s160, %s149
        $region28: #{tpu_custom_call.1} parent=23 // pred_fallthru
          _
      $region24: #{tpu_custom_call.1} parent=5 // pred_fallthru
        _
      %p163 = scmp.le.s32.totalorder 1, %s16
      %p164 = scmp.lt.s32.totalorder %s16, 3
      %p165 = pnand %p163, %p164
      %p166 = pneg %p165
      // Predicated region
      $region29: #{tpu_custom_call.1} parent=5 // pred_check
        _
      $region30: #{tpu_custom_call.1} parent=5 // pred_check_branch
        %168 = sbr.rel (%p165) target = $region32
      $region31: #{tpu_custom_call.1} parent=5 // pred_region
        %s169 = ssub.s32 %s16, 1
        %s170 = sand.u32 %s29, 1
        %s171 = scalar_lea.sflag [#allocation3], %s170
        %s172 = sand.u32 %s29, 1
        %s173 = smul.addr %s172, 8
        %s174 = scalar_lea.vmem [#allocation2], %s173
        // Predicated region
        $region33: #{tpu_custom_call.1} parent=31 // pred_check
          %p175 = pneg %p42
        $region34: #{tpu_custom_call.1} parent=31 // pred_check_branch
          %177 = sbr.rel (%p175) target = $region36
        $region35: #{tpu_custom_call.1} parent=31 // pred_region
          %178 = dma.done %s171, 128
        $region36: #{tpu_custom_call.1} parent=31 // pred_fallthru
          _
        // Predicated region
        $region37: #{tpu_custom_call.1} parent=31 // pred_check
          %p179 = pneg %p63
        $region38: #{tpu_custom_call.1} parent=31 // pred_check_branch
          %181 = sbr.rel (%p179) target = $region40
        $region39: #{tpu_custom_call.1} parent=31 // pred_region
          %182 = dma.done [#allocation6], 256
        $region40: #{tpu_custom_call.1} parent=31 // pred_fallthru
          _
        %s183 = sand.u32 %s29, 1
        %s184 = scalar_lea.sflag [#allocation3], %s183
        %s185 = sand.u32 %s29, 1
        %s186 = smul.addr %s185, 8
        %s187 = scalar_lea.vmem [#allocation2], %s186
        %p188 = pneg %p42
        %p189 = pneg %p39
        %p190 = pneg %p63
        %p191 = pneg %p60
        %p192 = pneg %p84
        %p193 = pneg %p81
        %p194 = pneg %p110
        %p195 = pneg %p107
        %s196 = sand.u32 %s97, 1
        %s197 = scalar_lea.sflag [#allocation4], %s196
        %s198 = sand.u32 %s97, 1
        %s199 = smul.addr %s198, 8
        %s200 = scalar_lea.vmem [#allocation7], %s199
        %v201 = vld [vmem:[%s174] sm:$0xff]
        %v202 = vld [vmem:[#allocation5] sm:$0xff]
        %v203 = vld [vmem:[#allocation5 + $0x8] sm:$0xf]
        %v204 = vld [vmem:[%s2] sm:$0x1]
        %v206 = vlaneseq
        %v207 = vshrl.u32 %v206, 7
        %v208 = vsub.s32 0, %v207
        %v209 = vrot.slane %v204, %v208
        %vm211 = vcmask 97280
        %v213 = vsel %vm211, %v201, 0
        %vm215 = vcmask 1043456
        %v217 = vsel %vm215, %v203, 0
        %219 = vmatprep.subr.mxu0 0.0
        %220 = vmatpush1.msra.mxu0 %v202
        %221 = vmatprep.subr.mxu0 0.0
        %222 = vmatpush1.msra.mxu0 %v217
        %223 = vmatprep.subr.mxu0 0.0
        %224 = vmatpush1.msra.mxu0 0.0
        %225 = vmatprep.subr.mxu0 0.0
        %226 = vmatpush1.msra.mxu0 0.0
        %227 = vmatprep.subr.mxu0 0.0
        %228 = vmatpush1.msra.mxu0 0.0
        %229 = vmatprep.subr.mxu0 0.0
        %230 = vmatpush1.msra.mxu0 0.0
        %231 = vmatprep.subr.mxu0 0.0
        %232 = vmatpush1.msra.mxu0 0.0
        %233 = vmatprep.subr.mxu0 0.0
        %234 = vmatpush1.msra.mxu0 0.0
        %235 = vmatprep.subr.mxu0 0.0
        %236 = vmatpush1.msra.mxu0 0.0
        %237 = vmatprep.subr.mxu0 0.0
        %238 = vmatpush1.msra.mxu0 0.0
        %239 = vmatprep.subr.mxu0 0.0
        %240 = vmatpush1.msra.mxu0 0.0
        %241 = vmatprep.subr.mxu0 0.0
        %242 = vmatpush1.msra.mxu0 0.0
        %243 = vmatprep.subr.mxu0 0.0
        %244 = vmatpush1.msra.mxu0 0.0
        %245 = vmatprep.subr.mxu0 0.0
        %246 = vmatpush1.msra.mxu0 0.0
        %247 = vmatprep.subr.mxu0 0.0
        %248 = vmatpush1.msra.mxu0 0.0
        %249 = vmatprep.subr.mxu0 0.0
        %250 = vmatpush1.msra.mxu0 0.0
        %251 = vmatprep.subr.mxu0 0.0
        %252 = vmatpush1.msra.mxu0 0.0
        %253 = vmatprep.subr.mxu0 0.0
        %254 = vmatpush1.msra.mxu0 0.0
        %255 = vmatprep.subr.mxu0 0.0
        %256 = vmatpush1.msra.mxu0 0.0
        %257 = vmatprep.subr.mxu0 0.0
        %258 = vmatpush1.msra.mxu0 0.0
        %259 = vmatprep.subr.mxu0 0.0
        %260 = vmatpush1.msra.mxu0 0.0
        %261 = vmatprep.subr.mxu0 0.0
        %262 = vmatpush1.msra.mxu0 0.0
        %263 = vmatprep.subr.mxu0 0.0
        %264 = vmatpush1.msra.mxu0 0.0
        %265 = vmatprep.subr.mxu0 0.0
        %266 = vmatpush1.msra.mxu0 0.0
        %267 = vmatprep.subr.mxu0 0.0
        %268 = vmatpush1.msra.mxu0 0.0
        %269 = vmatprep.subr.mxu0 0.0
        %270 = vmatpush1.msra.mxu0 0.0
        %271 = vmatprep.subr.mxu0 0.0
        %272 = vmatpush1.msra.mxu0 0.0
        %273 = vmatprep.subr.mxu0 0.0
        %274 = vmatpush1.msra.mxu0 0.0
        %275 = vmatprep.subr.mxu0 0.0
        %276 = vmatpush1.msra.mxu0 0.0
        %277 = vmatprep.subr.mxu0 0.0
        %278 = vmatpush1.msra.mxu0 0.0
        %279 = vmatprep.subr.mxu0 0.0
        %280 = vmatpush1.msra.mxu0 0.0
        %281 = vmatprep.subr.mxu0 0.0
        %282 = vmatpush1.msra.mxu0 0.0
        %283 = vmatprep.mubr.f32.mxu0 0.0
        %284 = vmatmul.mubr.f32.gmra.mrb[0].mxu0 %v213
        %v285 = vpop.f32.mrb[0].mxu0
        %v286 = vadd.f32 %v209, %v285
        %v287 = vpop.f32.mrb[0].mxu0
        %288 = vdwg.mxu0
        %vm289 = vcmask 261120
        %290 = vst.msk [vmem:[%s200] sm:$0xff] %vm289, %v286
        %s291 = sand.u32 %s97, 1
        %s292 = scalar_lea.sflag [#allocation4], %s291
        %s293 = sand.u32 %s97, 1
        %s294 = smul.addr %s293, 8
        %s295 = scalar_lea.vmem [#allocation7], %s294
        // Predicated region
        $region41: #{tpu_custom_call.1} parent=31 // pred_check
          %p296 = pneg %p107
        $region42: #{tpu_custom_call.1} parent=31 // pred_check_branch
          %298 = sbr.rel (%p296) target = $region44
        $region43: #{tpu_custom_call.1} parent=31 // pred_region
          %s300 = ssub.s32 128, 128
          %301 = vsyncadd %s292, %s300
          %s302 = smul.addr %s21, 128
          %s303 = scalar_lea.hbm %s3, %s302
          %s305 = sshll.u32 %s295, 4
          %s306 = int_to_ptr.vmem [resolvable:$true] %s305
          %308 = dma.vmem_to_hbm [thread:$0]  %s306, 128, %s303, %s292
        $region44: #{tpu_custom_call.1} parent=31 // pred_fallthru
          _
      $region32: #{tpu_custom_call.1} parent=5 // pred_fallthru
        _
      %p309 = scmp.le.s32.totalorder 2, %s16
      // Predicated region
      $region45: #{tpu_custom_call.1} parent=5 // pred_check
        %p310 = pneg %p309
      $region46: #{tpu_custom_call.1} parent=5 // pred_check_branch
        %312 = sbr.rel (%p310) target = $region48
      $region47: #{tpu_custom_call.1} parent=5 // pred_region
        %s313 = ssub.s32 %s16, 2
        // Predicated region
        $region49: #{tpu_custom_call.1} parent=47 // pred_check
          %p314 = pneg %p113
        $region50: #{tpu_custom_call.1} parent=47 // pred_check_branch
          %316 = sbr.rel (%p314) target = $region52
        $region51: #{tpu_custom_call.1} parent=47 // pred_region
          %s317 = sand.u32 %s98, 1
          %s318 = scalar_lea.sflag [#allocation4], %s317
          %s319 = sand.u32 %s98, 1
          %s320 = smul.addr %s319, 8
          %s321 = scalar_lea.vmem [#allocation7], %s320
          %322 = dma.done %s318, 128
        $region52: #{tpu_custom_call.1} parent=47 // pred_fallthru
          _
      $region48: #{tpu_custom_call.1} parent=5 // pred_fallthru
        _
    $region6: #{tpu_custom_call.1} parent=1 // loop_footer
      %s20 = sadd.s32 1, %s16
    $region7: #{tpu_custom_call.1} parent=1 // loop_footer_branch
      %15 = sbr.rel target = $region3
    $region8: #{tpu_custom_call.1} parent=1 // loop_exit
      _
    %323 = vsyncpa [#allocation3], 1
    %s324 = scalar_lea.sflag [#allocation3], 1
    %325 = vsyncpa %s324, 1
    %326 = vsyncpa [#allocation6], 1
    %327 = vsyncpa [#allocation4], 1
    %s328 = scalar_lea.sflag [#allocation4], 1
    %329 = vsyncpa %s328, 1

</llo_original>
